<compile_context>
chip_gen: v7x
topology: tpu7x:2x2x1
jax: 0.10.0
libtpu: 0.0.40
codegen_flags: <defaults>
</compile_context>

<pallas_src>
import numpy as np
import jax
import jax.numpy as jnp
from jax.experimental import pallas as pl
from jax.experimental.pallas import tpu as pltpu


_TARGET_BLOCK_BYTES = 4 * 1024 * 1024  # ~4 MiB per grid step (v7x-friendly grain)


def _reverse_channels_kernel(x_ref, o_ref):
    # x_ref / o_ref: (n_blk, C, H*W) VMEM blocks.
    # Reverse the channel (sublane) axis with static slice copies; the HBM
    # read/write of the full block stays contiguous and lane-dense.
    num_channels = x_ref.shape[1]
    for c in range(num_channels):
        o_ref[:, c, :] = x_ref[:, num_channels - 1 - c, :]


def reverse2d(x: jax.Array, reverse: bool = False) -> jax.Array:
    """Pallas equivalent of Reverse2d.forward (NCHW channel reversal)."""
    assert x.ndim == 4, "expected NCHW input"
    del reverse  # the inverse of a reversal is the same reversal

    n, c, h, w = x.shape
    hw = h * w
    x3 = x.reshape(n, c, hw)  # free: NCHW is contiguous as (N, C, H*W)

    # Largest batch tile (a divisor of N) whose block is ~<= 4 MiB, so
    # input + output double-buffers fit the scoped-VMEM budget on all
    # generations while still amortizing the ~0.35 us per-step overhead.
    row_bytes = c * hw * x.dtype.itemsize
    n_blk = max(1, min(n, _TARGET_BLOCK_BYTES // max(row_bytes, 1)))
    while n % n_blk:
        n_blk -= 1

    grid = (n // n_blk,)
    block = (n_blk, c, hw)  # last two dims span the full array dims -> legal tiling

    out3 = pl.pallas_call(
        _reverse_channels_kernel,
        out_shape=jax.ShapeDtypeStruct((n, c, hw), x.dtype),
        grid=grid,
        in_specs=[pl.BlockSpec(block, lambda i: (i, 0, 0))],
        out_specs=pl.BlockSpec(block, lambda i: (i, 0, 0)),
        compiler_params=pltpu.CompilerParams(
            dimension_semantics=("parallel",),
            vmem_limit_bytes=32 * 1024 * 1024,
        ),
    )(x3)

    return out3.reshape(n, c, h, w)


if __name__ == "__main__":
    key = jax.random.PRNGKey(0)
    N, C, H, W = 2, 4, 16, 16
    x = jax.random.normal(key, (N, C, H, W), dtype=jnp.float32)

    # Host-side (numpy) reference indices, matching the PyTorch module.
    indices = np.arange(C - 1, -1, -1)
    indices_inverse = np.argsort(indices)

    # Forward.
    y = jax.block_until_ready(reverse2d(x, reverse=False))
    y_ref = x[:, indices, :, :]
    assert jnp.array_equal(y, y_ref), "forward permutation mismatch"

    # Reverse should invert the forward pass.
    x_rec = jax.block_until_ready(reverse2d(y, reverse=True))
    x_rec_ref = y[:, indices_inverse, :, :]
    assert jnp.array_equal(x_rec, x_rec_ref), "reverse permutation mismatch"
    assert jnp.array_equal(x_rec, x), "round-trip mismatch"

    print("KERNEL_OK")
</pallas_src>

<mosaic_0001>
module attributes {stable_mosaic.version = 11 : i64} {
  func.func @_reverse_channels_kernel(%arg0: i32, %arg1: memref<2x4x256xf32, #tpu.memory_space<vmem>>, %arg2: memref<2x4x256xf32, #tpu.memory_space<vmem>>) attributes {dimension_semantics = [#tpu.dimension_semantics<parallel>], iteration_bounds = array<i64: 1>, scalar_prefetch = 0 : i64, scratch_operands = 0 : i64, tpu.core_type = #tpu.core_type<tc>, window_params = [{transform_indices = @transform_0, window_bounds = array<i64: 2, 4, 256>}, {transform_indices = @transform_1, window_bounds = array<i64: 2, 4, 256>}]} {
    %c0 = arith.constant 0 : index
    %c3 = arith.constant 3 : index
    %c0_0 = arith.constant 0 : index
    %0 = vector.load %arg1[%c0, %c3, %c0_0] : memref<2x4x256xf32, #tpu.memory_space<vmem>>, vector<2x1x256xf32>
    %1 = vector.shape_cast %0 : vector<2x1x256xf32> to vector<2x256xf32>
    %c0_1 = arith.constant 0 : index
    %c0_2 = arith.constant 0 : index
    %c0_3 = arith.constant 0 : index
    %2 = vector.load %arg2[%c0_1, %c0_2, %c0_3] : memref<2x4x256xf32, #tpu.memory_space<vmem>>, vector<2x1x256xf32>
    %3 = vector.shape_cast %2 : vector<2x1x256xf32> to vector<2x256xf32>
    %4 = vector.shape_cast %1 : vector<2x256xf32> to vector<2x1x256xf32>
    tpu.vector_store %arg2[%c0_1, %c0_2, %c0_3], %4 {strides = array<i32>} : memref<2x4x256xf32, #tpu.memory_space<vmem>>, vector<2x1x256xf32>,
    %c0_4 = arith.constant 0 : index
    %c2 = arith.constant 2 : index
    %c0_5 = arith.constant 0 : index
    %5 = vector.load %arg1[%c0_4, %c2, %c0_5] : memref<2x4x256xf32, #tpu.memory_space<vmem>>, vector<2x1x256xf32>
    %6 = vector.shape_cast %5 : vector<2x1x256xf32> to vector<2x256xf32>
    %c0_6 = arith.constant 0 : index
    %c1 = arith.constant 1 : index
    %c0_7 = arith.constant 0 : index
    %7 = vector.load %arg2[%c0_6, %c1, %c0_7] : memref<2x4x256xf32, #tpu.memory_space<vmem>>, vector<2x1x256xf32>
    %8 = vector.shape_cast %7 : vector<2x1x256xf32> to vector<2x256xf32>
    %9 = vector.shape_cast %6 : vector<2x256xf32> to vector<2x1x256xf32>
    tpu.vector_store %arg2[%c0_6, %c1, %c0_7], %9 {strides = array<i32>} : memref<2x4x256xf32, #tpu.memory_space<vmem>>, vector<2x1x256xf32>,
    %c0_8 = arith.constant 0 : index
    %c1_9 = arith.constant 1 : index
    %c0_10 = arith.constant 0 : index
    %10 = vector.load %arg1[%c0_8, %c1_9, %c0_10] : memref<2x4x256xf32, #tpu.memory_space<vmem>>, vector<2x1x256xf32>
    %11 = vector.shape_cast %10 : vector<2x1x256xf32> to vector<2x256xf32>
    %c0_11 = arith.constant 0 : index
    %c2_12 = arith.constant 2 : index
    %c0_13 = arith.constant 0 : index
    %12 = vector.load %arg2[%c0_11, %c2_12, %c0_13] : memref<2x4x256xf32, #tpu.memory_space<vmem>>, vector<2x1x256xf32>
    %13 = vector.shape_cast %12 : vector<2x1x256xf32> to vector<2x256xf32>
    %14 = vector.shape_cast %11 : vector<2x256xf32> to vector<2x1x256xf32>
    tpu.vector_store %arg2[%c0_11, %c2_12, %c0_13], %14 {strides = array<i32>} : memref<2x4x256xf32, #tpu.memory_space<vmem>>, vector<2x1x256xf32>,
    %c0_14 = arith.constant 0 : index
    %c0_15 = arith.constant 0 : index
    %c0_16 = arith.constant 0 : index
    %15 = vector.load %arg1[%c0_14, %c0_15, %c0_16] : memref<2x4x256xf32, #tpu.memory_space<vmem>>, vector<2x1x256xf32>
    %16 = vector.shape_cast %15 : vector<2x1x256xf32> to vector<2x256xf32>
    %c0_17 = arith.constant 0 : index
    %c3_18 = arith.constant 3 : index
    %c0_19 = arith.constant 0 : index
    %17 = vector.load %arg2[%c0_17, %c3_18, %c0_19] : memref<2x4x256xf32, #tpu.memory_space<vmem>>, vector<2x1x256xf32>
    %18 = vector.shape_cast %17 : vector<2x1x256xf32> to vector<2x256xf32>
    %19 = vector.shape_cast %16 : vector<2x256xf32> to vector<2x1x256xf32>
    tpu.vector_store %arg2[%c0_17, %c3_18, %c0_19], %19 {strides = array<i32>} : memref<2x4x256xf32, #tpu.memory_space<vmem>>, vector<2x1x256xf32>,
    return
  }
  func.func @transform_0(%arg0: i32) -> (i32, i32, i32) {
    %c0_i32 = arith.constant 0 : i32
    %c0_i32_0 = arith.constant 0 : i32
    %c0_i32_1 = arith.constant 0 : i32
    return %arg0, %c0_i32, %c0_i32_0 : i32, i32, i32
  }
  func.func @transform_1(%arg0: i32) -> (i32, i32, i32) {
    %c0_i32 = arith.constant 0 : i32
    %c0_i32_0 = arith.constant 0 : i32
    %c0_i32_1 = arith.constant 0 : i32
    return %arg0, %c0_i32, %c0_i32_0 : i32, i32, i32
  }
}

</mosaic_0001>

<llo_original>
// kernel: tpu_custom_call.1
$region0: #{tpu_custom_call.1}
  #allocation0 [shape = 'u32[]', space=smem, size = 0x4, offset = 0x4, fixed_abs, tag = 'smem constant byte address 0x4 - core index']
  #allocation1 [shape = 'u32[144,128]{1,0:T(1,128)}', space=vmem, size = 0x12000, scoped, tag = 'internal scratch']
  %s0 = inlined_call_operand.hbm [shape: f32[2,4,256], index: 0, kind: input, shape index: {}]
  %s1 = inlined_call_operand.hbm [shape: f32[2,4,256], index: 1, kind: output, shape index: {}]
  %s2 = sld [smem:[#allocation0]]
  $region18: #{tpu_custom_call.1} parent=0
    _
  %s4 = ssub.s32 1, %s2
  %s5 = scalar_select 0, %s4, %s2
  $region1: #{tpu_custom_call.1} parent=0
    #allocation2 [shape = 'u8[8192]{0}', space=vmem, size = 0x2000, scoped, tag = 'input window, operand 0, single buffered']
    #allocation3 [shape = 's32[1]{0}', space=sflag, size = 0x4, scoped, tag = 'scoped memory for tpu_custom_call.1']
    #allocation4 [shape = 's32[1]{0}', space=sflag, size = 0x4, scoped, tag = 'scoped memory for tpu_custom_call.1']
    #allocation5 [shape = 'u8[8192]{0}', space=vmem, size = 0x2000, scoped, tag = 'output window, operand 0, single buffered']
    %6 = vsyncpa [#allocation3], 0
    %7 = vsyncpa [#allocation4], 0
    // Predicated region
    $region2: #{tpu_custom_call.1} parent=1 // pred_check
      _
    $region3: #{tpu_custom_call.1} parent=1 // pred_check_branch
      %9 = sbr.rel (0) target = $region5
    $region4: #{tpu_custom_call.1} parent=1 // pred_region
      %s11 = ssub.s32 256, 256
      %12 = vsyncadd [#allocation3], %s11
      %s13 = sshll.u32 [#allocation2], 4
      %s14 = int_to_ptr.vmem [resolvable:$true] %s13
      %19 = dma.hbm_to_vmem [thread:$0]  %s0, 256, %s14, [#allocation3], 128, 128, 8
    $region5: #{tpu_custom_call.1} parent=1 // pred_fallthru
      _
    // Predicated region
    $region6: #{tpu_custom_call.1} parent=1 // pred_check
      _
    $region7: #{tpu_custom_call.1} parent=1 // pred_check_branch
      %21 = sbr.rel (0) target = $region9
    $region8: #{tpu_custom_call.1} parent=1 // pred_region
      %22 = dma.done [#allocation3], 256
    $region9: #{tpu_custom_call.1} parent=1 // pred_fallthru
      _
    %s23 = scalar_lea.vmem [#allocation2], 3
    %v24 = vld [vmem:[%s23] ss:$4 sm:$0x3]
    %s25 = scalar_lea.vmem [#allocation2], 11
    %v26 = vld [vmem:[%s25] ss:$4 sm:$0x3]
    %v27 = vlaneseq
    %vm28 = vcmp.ge.s32.totalorder %v27, 0
    %vm29 = vcmp.lt.s32.totalorder %v27, 256
    %vm30 = vmand %vm28, %vm29
    %31 = vst.msk [vmem:[#allocation5] ss:$4 sm:$0x3] %vm30, %v24
    %s32 = scalar_lea.vmem [#allocation5], 8
    %33 = vst.msk [vmem:[%s32] ss:$4 sm:$0x3] %vm30, %v26
    %s34 = scalar_lea.vmem [#allocation2], 2
    %v35 = vld [vmem:[%s34] ss:$4 sm:$0x3]
    %s36 = scalar_lea.vmem [#allocation2], 10
    %v37 = vld [vmem:[%s36] ss:$4 sm:$0x3]
    %s38 = scalar_lea.vmem [#allocation5], 1
    %39 = vst.msk [vmem:[%s38] ss:$4 sm:$0x3] %vm30, %v35
    %s40 = scalar_lea.vmem [#allocation5], 9
    %41 = vst.msk [vmem:[%s40] ss:$4 sm:$0x3] %vm30, %v37
    %s42 = scalar_lea.vmem [#allocation2], 1
    %v43 = vld [vmem:[%s42] ss:$4 sm:$0x3]
    %s44 = scalar_lea.vmem [#allocation2], 9
    %v45 = vld [vmem:[%s44] ss:$4 sm:$0x3]
    %s46 = scalar_lea.vmem [#allocation5], 2
    %47 = vst.msk [vmem:[%s46] ss:$4 sm:$0x3] %vm30, %v43
    %s48 = scalar_lea.vmem [#allocation5], 10
    %49 = vst.msk [vmem:[%s48] ss:$4 sm:$0x3] %vm30, %v45
    %v50 = vld [vmem:[#allocation2] ss:$4 sm:$0x3]
    %s51 = scalar_lea.vmem [#allocation2], 8
    %v52 = vld [vmem:[%s51] ss:$4 sm:$0x3]
    %s53 = scalar_lea.vmem [#allocation5], 3
    %54 = vst.msk [vmem:[%s53] ss:$4 sm:$0x3] %vm30, %v50
    %s55 = scalar_lea.vmem [#allocation5], 11
    %56 = vst.msk [vmem:[%s55] ss:$4 sm:$0x3] %vm30, %v52
    // Predicated region
    $region10: #{tpu_custom_call.1} parent=1 // pred_check
      _
    $region11: #{tpu_custom_call.1} parent=1 // pred_check_branch
      %58 = sbr.rel (0) target = $region13
    $region12: #{tpu_custom_call.1} parent=1 // pred_region
      %s60 = ssub.s32 256, 256
      %61 = vsyncadd [#allocation4], %s60
      %s62 = sshll.u32 [#allocation5], 4
      %s63 = int_to_ptr.vmem [resolvable:$true] %s62
      %68 = dma.vmem_to_hbm [thread:$0]  %s63, 256, %s1, [#allocation4], 128, 128, 8
    $region13: #{tpu_custom_call.1} parent=1 // pred_fallthru
      _
    // Predicated region
    $region14: #{tpu_custom_call.1} parent=1 // pred_check
      _
    $region15: #{tpu_custom_call.1} parent=1 // pred_check_branch
      %70 = sbr.rel (0) target = $region17
    $region16: #{tpu_custom_call.1} parent=1 // pred_region
      %71 = dma.done [#allocation4], 256
    $region17: #{tpu_custom_call.1} parent=1 // pred_fallthru
      _
    %72 = vsyncpa [#allocation3], 1
    %73 = vsyncpa [#allocation4], 1

</llo_original>
